<compile_context>
chip_gen: v7x
topology: tpu7x:2x2x1
jax: 0.10.0
libtpu: 0.0.40
codegen_flags: <defaults>
</compile_context>

<pallas_src>
import jax
import jax.numpy as jnp
from jax.experimental import pallas as pl
from jax.experimental.pallas import tpu as pltpu


def _round_up(a, b):
    return -(-a // b) * b


def _fix_row_ends(h_row, x_row, w):
    """Exact horizontal diff for one (1, W) row: zero pad outside the image."""
    col = jax.lax.broadcasted_iota(jnp.int32, (1, w), 1)
    h_row = jnp.where(col == 0, x_row[:, 1:2], h_row)            # x[1] - 0
    h_row = jnp.where(col == w - 1, -x_row[:, w - 2:w - 1], h_row)  # 0 - x[W-2]
    return h_row


def _gradient_tile(x, top, bot, o_ref):
    """sqrt(v^2 + h^2 + eps) for one (TH, W) f32 tile, written into o_ref.

    x   : (TH, W) f32 tile.
    top : (1, W)  f32 row directly above the tile (zeros at the image top).
    bot : (1, W)  f32 row directly below the tile (zeros at the image bottom).
    """
    th, w = x.shape
    eps = jnp.float32(1e-6)

    # Bulk shifted differences via XLU rotations (off the VALU slot).
    # roll(x, s)[i] = x[i - s]; the wrapped boundary rows/cols are overwritten
    # with exact values below.
    v = pltpu.roll(x, th - 1, axis=0) - pltpu.roll(x, 1, axis=0)   # x[i+1]-x[i-1]
    h = pltpu.roll(x, w - 1, axis=1) - pltpu.roll(x, 1, axis=1)    # x[j+1]-x[j-1]
    o_ref[...] = jnp.sqrt(v * v + h * h + eps)

    # Exact boundary COLUMNS (zero padding left/right of the image), all rows.
    h_l = x[:, 1:2]                       # h[:, 0]   =  x[:, 1] - 0
    h_r = -x[:, w - 2:w - 1]              # h[:, W-1] =  0 - x[:, W-2]  (exact sign)
    v_l = v[:, 0:1]
    v_r = v[:, w - 1:w]
    o_ref[:, 0:1] = jnp.sqrt(v_l * v_l + h_l * h_l + eps)
    o_ref[:, w - 1:w] = jnp.sqrt(v_r * v_r + h_r * h_r + eps)

    # Exact boundary ROWS (inter-tile halo / zero padding), written last so
    # the four corners end up fully corrected.
    v_t = x[1:2, :] - top
    v_b = bot - x[th - 2:th - 1, :]
    h_t = _fix_row_ends(h[0:1, :], x[0:1, :], w)
    h_b = _fix_row_ends(h[th - 1:th, :], x[th - 1:th, :], w)
    o_ref[0:1, :] = jnp.sqrt(v_t * v_t + h_t * h_t + eps)
    o_ref[th - 1:th, :] = jnp.sqrt(v_b * v_b + h_b * h_b + eps)


def _grad_kernel_halo(x_ref, top_ref, bot_ref, o_ref):
    """Row-tiled variant: halo rows come from two small extra views of x."""
    x = x_ref[...].astype(jnp.float32)
    halo = top_ref.shape[0]
    hb = pl.program_id(1)
    last = pl.num_programs(1) - 1
    top = top_ref[halo - 1:halo, :].astype(jnp.float32)   # last row = global h*TH - 1
    bot = bot_ref[0:1, :].astype(jnp.float32)             # first row = global (h+1)*TH
    top = jnp.where(hb == 0, jnp.zeros_like(top), top)    # zero pad at image top
    bot = jnp.where(hb == last, jnp.zeros_like(bot), bot)  # zero pad at image bottom
    _gradient_tile(x, top, bot, o_ref)


def _grad_kernel_single(x_ref, o_ref):
    """Whole (padded) image height in one tile: no halo DMAs at all."""
    x = x_ref[...].astype(jnp.float32)
    zero = jnp.zeros((1, x.shape[1]), jnp.float32)
    _gradient_tile(x, zero, zero, o_ref)


def get_gradient_nopadding(x, *, tile_budget_bytes=4 * 1024 * 1024):
    """Pallas equivalent of Get_gradient_nopadding.forward: NCHW -> (N,1,H,W) f32."""
    N, C, H, W = x.shape
    assert H >= 2 and W >= 2, "spatial dims must be >= 2"

    itemsize = jnp.dtype(x.dtype).itemsize
    sub = {4: 8, 2: 16, 1: 32}.get(itemsize, 8)   # native sublane packing

    # Lane-dense output width: pad W up to a multiple of 128 only when W > 128
    # (small widths already use the full-dim block and padding would inflate
    # HBM traffic).
    Wp = W if (W % 128 == 0 or W < 128) else _round_up(W, 128)

    # Tile height: ceil-split H into n_h tiles of ~tile_budget f32 bytes, each
    # a multiple of the sublane packing.  When N == 1, force >= 2 row tiles
    # (when H allows) so dual-TensorCore chips shard the grid.
    cap = max(sub, (tile_budget_bytes // (4 * Wp)) // sub * sub)
    n_h = max(1, -(-H // cap))
    if N == 1 and _round_up(H, sub) >= 2 * sub:
        n_h = max(n_h, 2)
    th = _round_up(-(-H // n_h), sub)
    Hp = n_h * th

    # Pad channel 0 when spatial alignment is needed.  Zero padding reproduces
    # the conv's own zero padding, so the kept HxW region is exact; padded
    # rows/cols are sliced off below.
    if Hp != H or Wp != W:
        x_in = jnp.pad(x[:, 0:1], ((0, 0), (0, 0), (0, Hp - H), (0, Wp - W)))
    else:
        x_in = x   # channel 0 is selected by the BlockSpec (no wrapper copy)

    out_shape = jax.ShapeDtypeStruct((N, 1, Hp, Wp), jnp.float32)
    cparams = pltpu.CompilerParams(
        dimension_semantics=("parallel",) if n_h == 1 else ("parallel", "parallel"),
        vmem_limit_bytes=48 * 1024 * 1024,
    )

    if n_h == 1:
        out = pl.pallas_call(
            _grad_kernel_single,
            out_shape=out_shape,
            grid=(N,),
            in_specs=[pl.BlockSpec((None, None, th, Wp), lambda n: (n, 0, 0, 0))],
            out_specs=pl.BlockSpec((None, None, th, Wp), lambda n: (n, 0, 0, 0)),
            compiler_params=cparams,
        )(x_in)
    else:
        halo = sub                       # smallest legal halo block height
        thb = th // halo                 # main-tile height in halo blocks
        n_halo_blocks = Hp // halo
        main_spec = pl.BlockSpec((None, None, th, Wp), lambda n, hh: (n, 0, hh, 0))
        top_spec = pl.BlockSpec(
            (None, None, halo, Wp),
            lambda n, hh: (n, 0, jnp.maximum(hh * thb - 1, 0), 0))
        bot_spec = pl.BlockSpec(
            (None, None, halo, Wp),
            lambda n, hh: (n, 0, jnp.minimum((hh + 1) * thb, n_halo_blocks - 1), 0))
        out_spec = pl.BlockSpec((None, None, th, Wp), lambda n, hh: (n, 0, hh, 0))
        out = pl.pallas_call(
            _grad_kernel_halo,
            out_shape=out_shape,
            grid=(N, n_h),
            in_specs=[main_spec, top_spec, bot_spec],
            out_specs=out_spec,
            compiler_params=cparams,
        )(x_in, x_in, x_in)

    if Hp != H or Wp != W:
        out = out[:, :, :H, :W]
    return out


def _reference(x):
    # Pure-JAX reference (shifted differences with zero padding).
    x0 = x[:, 0].astype(jnp.float32)
    v = jnp.pad(x0, ((0, 0), (0, 1), (0, 0)))[:, 1:, :] \
        - jnp.pad(x0, ((0, 0), (1, 0), (0, 0)))[:, :-1, :]
    h = jnp.pad(x0, ((0, 0), (0, 0), (0, 1)))[:, :, 1:] \
        - jnp.pad(x0, ((0, 0), (0, 0), (1, 0)))[:, :, :-1]
    return jnp.sqrt(v * v + h * h + 1e-6)[:, None, :, :]


if __name__ == "__main__":
    keys = jax.random.split(jax.random.PRNGKey(0), 5)

    # 1) Canonical small case: no padding, single-tile (no-halo) kernel, grid=(N,).
    x = jax.random.normal(keys[0], (2, 4, 16, 16), dtype=jnp.float32)
    y = jax.block_until_ready(get_gradient_nopadding(x))
    assert y.shape == (2, 1, 16, 16) and y.dtype == jnp.float32
    assert jnp.allclose(y, _reference(x), atol=1e-5, rtol=1e-5)

    # 2) Row-tiled halo path (4 H-tiles) + in-kernel bf16 -> f32 cast.
    x2 = jax.random.normal(keys[1], (1, 3, 64, 32), dtype=jnp.bfloat16)
    y2 = jax.block_until_ready(get_gradient_nopadding(x2, tile_budget_bytes=2048))
    assert jnp.allclose(y2, _reference(x2), atol=1e-4, rtol=1e-4)

    # 3) H not a multiple of the sublane packing -> wrapper row padding + halo path.
    x3 = jax.random.normal(keys[2], (1, 2, 10, 16), dtype=jnp.float32)
    y3 = jax.block_until_ready(get_gradient_nopadding(x3))
    assert y3.shape == (1, 1, 10, 16)
    assert jnp.allclose(y3, _reference(x3), atol=1e-5, rtol=1e-5)

    # 4) bf16 with odd H -> row padding + single-tile kernel (pins that lowering).
    x4 = jax.random.normal(keys[3], (1, 1, 13, 24), dtype=jnp.bfloat16)
    y4 = jax.block_until_ready(get_gradient_nopadding(x4))
    assert y4.shape == (1, 1, 13, 24)
    assert jnp.allclose(y4, _reference(x4), atol=1e-4, rtol=1e-4)

    # 5) W > 128 and not a multiple of 128 -> lane-dense W padding + halo path.
    x5 = jax.random.normal(keys[4], (1, 2, 16, 200), dtype=jnp.float32)
    y5 = jax.block_until_ready(get_gradient_nopadding(x5))
    assert y5.shape == (1, 1, 16, 200)
    assert jnp.allclose(y5, _reference(x5), atol=1e-5, rtol=1e-5)

    print("KERNEL_OK")
</pallas_src>

<mosaic_0001>
module attributes {stable_mosaic.version = 11 : i64} {
  func.func @_grad_kernel_single(%arg0: i32, %arg1: memref<1x1x16x16xf32, #tpu.memory_space<vmem>>, %arg2: memref<1x1x16x16xf32, #tpu.memory_space<vmem>>) attributes {dimension_semantics = [#tpu.dimension_semantics<parallel>], iteration_bounds = array<i64: 2>, scalar_prefetch = 0 : i64, scratch_operands = 0 : i64, tpu.core_type = #tpu.core_type<tc>, window_params = [{transform_indices = @transform_0, window_bounds = array<i64: 1, 1, 16, 16>}, {transform_indices = @transform_1, window_bounds = array<i64: 1, 1, 16, 16>}]} {
    %c0 = arith.constant 0 : index
    %c0_0 = arith.constant 0 : index
    %c0_1 = arith.constant 0 : index
    %c0_2 = arith.constant 0 : index
    %0 = vector.load %arg1[%c0, %c0_0, %c0_1, %c0_2] : memref<1x1x16x16xf32, #tpu.memory_space<vmem>>, vector<1x1x16x16xf32>
    %1 = vector.shape_cast %0 : vector<1x1x16x16xf32> to vector<16x16xf32>
    %cst = arith.constant 0.000000e+00 : f32
    %2 = vector.broadcast %cst : f32 to vector<1x16xf32>
    %c15_i32 = arith.constant 15 : i32
    %3 = tpu.dynamic_rotate %1 by %c15_i32 dim 0 : vector<16x16xf32>, i32 -> vector<16x16xf32>
    %c1_i32 = arith.constant 1 : i32
    %4 = tpu.dynamic_rotate %1 by %c1_i32 dim 0 : vector<16x16xf32>, i32 -> vector<16x16xf32>
    %5 = arith.subf %3, %4 : vector<16x16xf32>
    %c15_i32_3 = arith.constant 15 : i32
    %6 = tpu.dynamic_rotate %1 by %c15_i32_3 dim 1 : vector<16x16xf32>, i32 -> vector<16x16xf32>
    %c1_i32_4 = arith.constant 1 : i32
    %7 = tpu.dynamic_rotate %1 by %c1_i32_4 dim 1 : vector<16x16xf32>, i32 -> vector<16x16xf32>
    %8 = arith.subf %6, %7 : vector<16x16xf32>
    %9 = arith.mulf %5, %5 : vector<16x16xf32>
    %10 = arith.mulf %8, %8 : vector<16x16xf32>
    %11 = arith.addf %9, %10 : vector<16x16xf32>
    %cst_5 = arith.constant 9.99999997E-7 : f32
    %12 = vector.broadcast %cst_5 : f32 to vector<16x16xf32>
    %13 = arith.addf %11, %12 : vector<16x16xf32>
    %14 = math.sqrt %13 : vector<16x16xf32>
    %c0_6 = arith.constant 0 : index
    %c0_7 = arith.constant 0 : index
    %c0_8 = arith.constant 0 : index
    %c0_9 = arith.constant 0 : index
    %15 = vector.load %arg2[%c0_6, %c0_7, %c0_8, %c0_9] : memref<1x1x16x16xf32, #tpu.memory_space<vmem>>, vector<1x1x16x16xf32>
    %16 = vector.shape_cast %15 : vector<1x1x16x16xf32> to vector<16x16xf32>
    %17 = vector.shape_cast %14 : vector<16x16xf32> to vector<1x1x16x16xf32>
    tpu.vector_store %arg2[%c0_6, %c0_7, %c0_8, %c0_9], %17 {strides = array<i32>} : memref<1x1x16x16xf32, #tpu.memory_space<vmem>>, vector<1x1x16x16xf32>,
    %18 = vector.extract_strided_slice %1 {offsets = [0, 1], sizes = [16, 1], strides = [1, 1]} : vector<16x16xf32> to vector<16x1xf32>
    %19 = vector.extract_strided_slice %1 {offsets = [0, 14], sizes = [16, 1], strides = [1, 1]} : vector<16x16xf32> to vector<16x1xf32>
    %cst_10 = arith.constant 0.000000e+00 : f32
    %20 = vector.broadcast %cst_10 : f32 to vector<16x1xf32>
    %21 = arith.subf %20, %19 : vector<16x1xf32>
    %22 = vector.extract_strided_slice %5 {offsets = [0, 0], sizes = [16, 1], strides = [1, 1]} : vector<16x16xf32> to vector<16x1xf32>
    %23 = vector.extract_strided_slice %5 {offsets = [0, 15], sizes = [16, 1], strides = [1, 1]} : vector<16x16xf32> to vector<16x1xf32>
    %24 = arith.mulf %22, %22 : vector<16x1xf32>
    %25 = arith.mulf %18, %18 : vector<16x1xf32>
    %26 = arith.addf %24, %25 : vector<16x1xf32>
    %cst_11 = arith.constant 9.99999997E-7 : f32
    %27 = vector.broadcast %cst_11 : f32 to vector<16x1xf32>
    %28 = arith.addf %26, %27 : vector<16x1xf32>
    %29 = math.sqrt %28 : vector<16x1xf32>
    %c0_12 = arith.constant 0 : index
    %c0_13 = arith.constant 0 : index
    %c0_14 = arith.constant 0 : index
    %c0_15 = arith.constant 0 : index
    %30 = vector.load %arg2[%c0_12, %c0_13, %c0_14, %c0_15] : memref<1x1x16x16xf32, #tpu.memory_space<vmem>>, vector<1x1x16x1xf32>
    %31 = vector.shape_cast %30 : vector<1x1x16x1xf32> to vector<16x1xf32>
    %32 = vector.shape_cast %29 : vector<16x1xf32> to vector<1x1x16x1xf32>
    tpu.vector_store %arg2[%c0_12, %c0_13, %c0_14, %c0_15], %32 {strides = array<i32>} : memref<1x1x16x16xf32, #tpu.memory_space<vmem>>, vector<1x1x16x1xf32>,
    %33 = arith.mulf %23, %23 : vector<16x1xf32>
    %34 = arith.mulf %21, %21 : vector<16x1xf32>
    %35 = arith.addf %33, %34 : vector<16x1xf32>
    %cst_16 = arith.constant 9.99999997E-7 : f32
    %36 = vector.broadcast %cst_16 : f32 to vector<16x1xf32>
    %37 = arith.addf %35, %36 : vector<16x1xf32>
    %38 = math.sqrt %37 : vector<16x1xf32>
    %c0_17 = arith.constant 0 : index
    %c0_18 = arith.constant 0 : index
    %c0_19 = arith.constant 0 : index
    %c15 = arith.constant 15 : index
    %39 = vector.load %arg2[%c0_17, %c0_18, %c0_19, %c15] : memref<1x1x16x16xf32, #tpu.memory_space<vmem>>, vector<1x1x16x1xf32>
    %40 = vector.shape_cast %39 : vector<1x1x16x1xf32> to vector<16x1xf32>
    %41 = vector.shape_cast %38 : vector<16x1xf32> to vector<1x1x16x1xf32>
    tpu.vector_store %arg2[%c0_17, %c0_18, %c0_19, %c15], %41 {strides = array<i32>} : memref<1x1x16x16xf32, #tpu.memory_space<vmem>>, vector<1x1x16x1xf32>,
    %42 = vector.extract_strided_slice %1 {offsets = [1, 0], sizes = [1, 16], strides = [1, 1]} : vector<16x16xf32> to vector<1x16xf32>
    %43 = arith.subf %42, %2 : vector<1x16xf32>
    %44 = vector.extract_strided_slice %1 {offsets = [14, 0], sizes = [1, 16], strides = [1, 1]} : vector<16x16xf32> to vector<1x16xf32>
    %45 = arith.subf %2, %44 : vector<1x16xf32>
    %46 = vector.extract_strided_slice %8 {offsets = [0, 0], sizes = [1, 16], strides = [1, 1]} : vector<16x16xf32> to vector<1x16xf32>
    %47 = vector.extract_strided_slice %1 {offsets = [0, 0], sizes = [1, 16], strides = [1, 1]} : vector<16x16xf32> to vector<1x16xf32>
    %48 = tpu.iota {dimensions = array<i32: 1>} : vector<1x16xi32>
    %c0_i32 = arith.constant 0 : i32
    %49 = vector.broadcast %c0_i32 : i32 to vector<1x16xi32>
    %50 = arith.cmpi eq, %48, %49 : vector<1x16xi32>
    %51 = vector.extract_strided_slice %47 {offsets = [0, 1], sizes = [1, 1], strides = [1, 1]} : vector<1x16xf32> to vector<1x1xf32>
    %52 = vector.shape_cast %51 : vector<1x1xf32> to vector<1x1xf32>
    %53 = vector.broadcast %52 : vector<1x1xf32> to vector<1x16xf32>
    %54 = arith.select %50, %53, %46 : vector<1x16xi1>, vector<1x16xf32>
    %c15_i32_20 = arith.constant 15 : i32
    %55 = vector.broadcast %c15_i32_20 : i32 to vector<1x16xi32>
    %56 = arith.cmpi eq, %48, %55 : vector<1x16xi32>
    %57 = vector.extract_strided_slice %47 {offsets = [0, 14], sizes = [1, 1], strides = [1, 1]} : vector<1x16xf32> to vector<1x1xf32>
    %cst_21 = arith.constant 0.000000e+00 : f32
    %58 = vector.broadcast %cst_21 : f32 to vector<1x1xf32>
    %59 = arith.subf %58, %57 : vector<1x1xf32>
    %60 = vector.shape_cast %59 : vector<1x1xf32> to vector<1x1xf32>
    %61 = vector.broadcast %60 : vector<1x1xf32> to vector<1x16xf32>
    %62 = arith.select %56, %61, %54 : vector<1x16xi1>, vector<1x16xf32>
    %63 = vector.extract_strided_slice %8 {offsets = [15, 0], sizes = [1, 16], strides = [1, 1]} : vector<16x16xf32> to vector<1x16xf32>
    %64 = vector.extract_strided_slice %1 {offsets = [15, 0], sizes = [1, 16], strides = [1, 1]} : vector<16x16xf32> to vector<1x16xf32>
    %65 = tpu.iota {dimensions = array<i32: 1>} : vector<1x16xi32>
    %c0_i32_22 = arith.constant 0 : i32
    %66 = vector.broadcast %c0_i32_22 : i32 to vector<1x16xi32>
    %67 = arith.cmpi eq, %65, %66 : vector<1x16xi32>
    %68 = vector.extract_strided_slice %64 {offsets = [0, 1], sizes = [1, 1], strides = [1, 1]} : vector<1x16xf32> to vector<1x1xf32>
    %69 = vector.shape_cast %68 : vector<1x1xf32> to vector<1x1xf32>
    %70 = vector.broadcast %69 : vector<1x1xf32> to vector<1x16xf32>
    %71 = arith.select %67, %70, %63 : vector<1x16xi1>, vector<1x16xf32>
    %c15_i32_23 = arith.constant 15 : i32
    %72 = vector.broadcast %c15_i32_23 : i32 to vector<1x16xi32>
    %73 = arith.cmpi eq, %65, %72 : vector<1x16xi32>
    %74 = vector.extract_strided_slice %64 {offsets = [0, 14], sizes = [1, 1], strides = [1, 1]} : vector<1x16xf32> to vector<1x1xf32>
    %cst_24 = arith.constant 0.000000e+00 : f32
    %75 = vector.broadcast %cst_24 : f32 to vector<1x1xf32>
    %76 = arith.subf %75, %74 : vector<1x1xf32>
    %77 = vector.shape_cast %76 : vector<1x1xf32> to vector<1x1xf32>
    %78 = vector.broadcast %77 : vector<1x1xf32> to vector<1x16xf32>
    %79 = arith.select %73, %78, %71 : vector<1x16xi1>, vector<1x16xf32>
    %80 = arith.mulf %43, %43 : vector<1x16xf32>
    %81 = arith.mulf %62, %62 : vector<1x16xf32>
    %82 = arith.addf %80, %81 : vector<1x16xf32>
    %cst_25 = arith.constant 9.99999997E-7 : f32
    %83 = vector.broadcast %cst_25 : f32 to vector<1x16xf32>
    %84 = arith.addf %82, %83 : vector<1x16xf32>
    %85 = math.sqrt %84 : vector<1x16xf32>
    %c0_26 = arith.constant 0 : index
    %c0_27 = arith.constant 0 : index
    %c0_28 = arith.constant 0 : index
    %c0_29 = arith.constant 0 : index
    %86 = vector.load %arg2[%c0_26, %c0_27, %c0_28, %c0_29] : memref<1x1x16x16xf32, #tpu.memory_space<vmem>>, vector<1x1x1x16xf32>
    %87 = vector.shape_cast %86 : vector<1x1x1x16xf32> to vector<1x16xf32>
    %88 = vector.shape_cast %85 : vector<1x16xf32> to vector<1x1x1x16xf32>
    tpu.vector_store %arg2[%c0_26, %c0_27, %c0_28, %c0_29], %88 {strides = array<i32>} : memref<1x1x16x16xf32, #tpu.memory_space<vmem>>, vector<1x1x1x16xf32>,
    %89 = arith.mulf %45, %45 : vector<1x16xf32>
    %90 = arith.mulf %79, %79 : vector<1x16xf32>
    %91 = arith.addf %89, %90 : vector<1x16xf32>
    %cst_30 = arith.constant 9.99999997E-7 : f32
    %92 = vector.broadcast %cst_30 : f32 to vector<1x16xf32>
    %93 = arith.addf %91, %92 : vector<1x16xf32>
    %94 = math.sqrt %93 : vector<1x16xf32>
    %c0_31 = arith.constant 0 : index
    %c0_32 = arith.constant 0 : index
    %c15_33 = arith.constant 15 : index
    %c0_34 = arith.constant 0 : index
    %95 = vector.load %arg2[%c0_31, %c0_32, %c15_33, %c0_34] : memref<1x1x16x16xf32, #tpu.memory_space<vmem>>, vector<1x1x1x16xf32>
    %96 = vector.shape_cast %95 : vector<1x1x1x16xf32> to vector<1x16xf32>
    %97 = vector.shape_cast %94 : vector<1x16xf32> to vector<1x1x1x16xf32>
    tpu.vector_store %arg2[%c0_31, %c0_32, %c15_33, %c0_34], %97 {strides = array<i32>} : memref<1x1x16x16xf32, #tpu.memory_space<vmem>>, vector<1x1x1x16xf32>,
    return
  }
  func.func @transform_0(%arg0: i32) -> (i32, i32, i32, i32) {
    %c0_i32 = arith.constant 0 : i32
    %c0_i32_0 = arith.constant 0 : i32
    %c0_i32_1 = arith.constant 0 : i32
    %c0_i32_2 = arith.constant 0 : i32
    return %arg0, %c0_i32, %c0_i32_0, %c0_i32_1 : i32, i32, i32, i32
  }
  func.func @transform_1(%arg0: i32) -> (i32, i32, i32, i32) {
    %c0_i32 = arith.constant 0 : i32
    %c0_i32_0 = arith.constant 0 : i32
    %c0_i32_1 = arith.constant 0 : i32
    %c0_i32_2 = arith.constant 0 : i32
    return %arg0, %c0_i32, %c0_i32_0, %c0_i32_1 : i32, i32, i32, i32
  }
}

</mosaic_0001>

<llo_original>
// kernel: tpu_custom_call.1
$region0: #{tpu_custom_call.1}
  #allocation0 [shape = 'u32[]', space=smem, size = 0x4, offset = 0x4, fixed_abs, tag = 'smem constant byte address 0x4 - core index']
  #allocation1 [shape = 'u32[144,128]{1,0:T(1,128)}', space=vmem, size = 0x12000, scoped, tag = 'internal scratch']
  %s0 = inlined_call_operand.hbm [shape: f32[2,4,16,16], index: 0, kind: input, shape index: {}]
  %s1 = inlined_call_operand.hbm [shape: f32[2,1,16,16], index: 1, kind: output, shape index: {}]
  %s2 = sld [smem:[#allocation0]]
  $region41: #{tpu_custom_call.1} parent=0
    _
  %s4 = ssub.s32 1, %s2
  %s5 = scalar_select 0, %s4, %s2
  $region1: #{tpu_custom_call.1} parent=0
    #allocation2 [shape = 'u8[16384]{0}', space=vmem, size = 0x4000, scoped, tag = 'input window, operand 0']
    #allocation3 [shape = 's32[2]{0}', space=sflag, size = 0x8, scoped, tag = 'scoped memory for tpu_custom_call.1']
    #allocation4 [shape = 's32[2]{0}', space=sflag, size = 0x8, scoped, tag = 'scoped memory for tpu_custom_call.1']
    #allocation5 [shape = 'u8[16384]{0}', space=vmem, size = 0x4000, scoped, tag = 'output window, operand 0']
    %6 = vsyncpa [#allocation3], 0
    %s7 = scalar_lea.sflag [#allocation3], 1
    %8 = vsyncpa %s7, 0
    %9 = vsyncpa [#allocation4], 0
    %s10 = scalar_lea.sflag [#allocation4], 1
    %11 = vsyncpa %s10, 0
    loop: start=0, step=1, limit=4
    $region2: #{tpu_custom_call.1} parent=1 // loop_pre_header
      _
    $region3: #{tpu_custom_call.1} parent=1 // loop_header
      %s13 = sphi 0, %s17
      %p14 = scmp.ge.s32.totalorder %s13, 4
      %s23 = sphi 0, %s25
      %s26 = sphi 0, %s23
      %s27 = sphi 0, %s26
      %s43 = sphi 0, %s27
      %s49 = sphi 0, %s51
      %s52 = sphi 0, %s49
      %s53 = sphi 0, %s52
      %s69 = sphi 0, %s53
    $region4: #{tpu_custom_call.1} parent=1 // loop_header_branch
      %16 = sbr.rel (%p14) target = $region8
    $region5: #{tpu_custom_call.1} parent=1 // loop_body
      %s18 = ssub.s32 %s13, 1
      %s19 = ssub.s32 %s13, 2
      %s20 = sadd.s32 %s13, 1
      %s21 = ssub.s32 %s13, %s20
      %p22 = scmp.eq.s32.totalorder %s21, 0
      %s24 = sadd.s32 %s23, 1
      %s25 = scalar_select %p22, %s23, %s24
      %p28 = pneg %p22
      %p29 = scmp.eq.s32.totalorder %s13, 1
      %p30 = por %p28, %p29
      %p31 = scmp.ne.s32.totalorder %s23, %s26
      %p32 = scmp.eq.s32.totalorder %s13, 0
      %p33 = por %p31, %p32
      %p34 = scmp.ne.s32.totalorder %s23, %s26
      %p35 = scmp.eq.s32.totalorder %s18, 1
      %p36 = por %p34, %p35
      %p37 = scmp.ne.s32.totalorder %s26, %s27
      %p38 = scmp.eq.s32.totalorder %s18, 0
      %p39 = por %p37, %p38
      %p40 = scmp.ne.s32.totalorder %s26, %s27
      %p41 = scmp.eq.s32.totalorder %s19, 1
      %p42 = por %p40, %p41
      %p44 = scmp.ne.s32.totalorder %s27, %s43
      %p45 = scmp.eq.s32.totalorder %s19, 0
      %p46 = por %p44, %p45
      %s47 = ssub.s32 %s13, %s20
      %p48 = scmp.eq.s32.totalorder %s47, 0
      %s50 = sadd.s32 %s49, 1
      %s51 = scalar_select %p48, %s49, %s50
      %p54 = pneg %p48
      %p55 = scmp.eq.s32.totalorder %s13, 1
      %p56 = por %p54, %p55
      %p57 = scmp.ne.s32.totalorder %s49, %s52
      %p58 = scmp.eq.s32.totalorder %s13, 0
      %p59 = por %p57, %p58
      %p60 = scmp.ne.s32.totalorder %s49, %s52
      %p61 = scmp.eq.s32.totalorder %s18, 1
      %p62 = por %p60, %p61
      %p63 = scmp.ne.s32.totalorder %s52, %s53
      %p64 = scmp.eq.s32.totalorder %s18, 0
      %p65 = por %p63, %p64
      %p66 = scmp.ne.s32.totalorder %s52, %s53
      %p67 = scmp.eq.s32.totalorder %s19, 1
      %p68 = por %p66, %p67
      %p70 = scmp.ne.s32.totalorder %s53, %s69
      %p71 = scmp.eq.s32.totalorder %s19, 0
      %p72 = por %p70, %p71
      %p73 = scmp.le.s32.totalorder 1, %s13
      %p74 = scmp.lt.s32.totalorder %s13, 3
      %p75 = pnand %p73, %p74
      %p76 = pneg %p75
      // Predicated region
      $region9: #{tpu_custom_call.1} parent=5 // pred_check
        _
      $region10: #{tpu_custom_call.1} parent=5 // pred_check_branch
        %78 = sbr.rel (%p75) target = $region12
      $region11: #{tpu_custom_call.1} parent=5 // pred_region
        %s79 = ssub.s32 %s13, 1
      $region12: #{tpu_custom_call.1} parent=5 // pred_fallthru
        _
      %p80 = scmp.lt.s32.totalorder %s13, 2
      // Predicated region
      $region13: #{tpu_custom_call.1} parent=5 // pred_check
        %p81 = pneg %p80
      $region14: #{tpu_custom_call.1} parent=5 // pred_check_branch
        %83 = sbr.rel (%p81) target = $region16
      $region15: #{tpu_custom_call.1} parent=5 // pred_region
        // Predicated region
        $region17: #{tpu_custom_call.1} parent=15 // pred_check
          %p84 = pneg %p33
        $region18: #{tpu_custom_call.1} parent=15 // pred_check_branch
          %86 = sbr.rel (%p84) target = $region20
        $region19: #{tpu_custom_call.1} parent=15 // pred_region
          %s87 = sand.u32 %s23, 1
          %s88 = scalar_lea.sflag [#allocation3], %s87
          %s89 = sand.u32 %s23, 1
          %s90 = smul.addr %s89, 16
          %s91 = scalar_lea.vmem [#allocation2], %s90
          %s93 = ssub.s32 256, 256
          %94 = vsyncadd %s88, %s93
          %s95 = smul.addr %s13, 8
          %s96 = smul.addr %s95, 128
          %s97 = scalar_lea.hbm %s0, %s96
          %s98 = sshll.u32 %s91, 4
          %s99 = int_to_ptr.vmem [resolvable:$true] %s98
          %104 = dma.hbm_to_vmem [thread:$0]  %s97, 256, %s99, %s88, 128, 128, 8
        $region20: #{tpu_custom_call.1} parent=15 // pred_fallthru
          _
      $region16: #{tpu_custom_call.1} parent=5 // pred_fallthru
        _
      %p105 = scmp.le.s32.totalorder 1, %s13
      %p106 = scmp.lt.s32.totalorder %s13, 3
      %p107 = pnand %p105, %p106
      %p108 = pneg %p107
      // Predicated region
      $region21: #{tpu_custom_call.1} parent=5 // pred_check
        _
      $region22: #{tpu_custom_call.1} parent=5 // pred_check_branch
        %110 = sbr.rel (%p107) target = $region24
      $region23: #{tpu_custom_call.1} parent=5 // pred_region
        %s111 = ssub.s32 %s13, 1
        %s112 = sand.u32 %s26, 1
        %s113 = scalar_lea.sflag [#allocation3], %s112
        %s114 = sand.u32 %s26, 1
        %s115 = smul.addr %s114, 16
        %s116 = scalar_lea.vmem [#allocation2], %s115
        // Predicated region
        $region25: #{tpu_custom_call.1} parent=23 // pred_check
          %p117 = pneg %p39
        $region26: #{tpu_custom_call.1} parent=23 // pred_check_branch
          %119 = sbr.rel (%p117) target = $region28
        $region27: #{tpu_custom_call.1} parent=23 // pred_region
          %120 = dma.done %s113, 256
        $region28: #{tpu_custom_call.1} parent=23 // pred_fallthru
          _
        %s121 = sand.u32 %s26, 1
        %s122 = scalar_lea.sflag [#allocation3], %s121
        %s123 = sand.u32 %s26, 1
        %s124 = smul.addr %s123, 16
        %s125 = scalar_lea.vmem [#allocation2], %s124
        %p126 = pneg %p39
        %p127 = pneg %p36
        %p128 = pneg %p65
        %p129 = pneg %p62
        %s130 = sand.u32 %s52, 1
        %s131 = scalar_lea.sflag [#allocation4], %s130
        %s132 = sand.u32 %s52, 1
        %s133 = smul.addr %s132, 16
        %s134 = scalar_lea.vmem [#allocation5], %s133
        %v135 = vld [vmem:[%s116] sm:$0xff]
        %v136 = vld [vmem:[%s116 + $0x8] sm:$0xff]
        %v137 = vrot.slane %v135, 1
        %v138 = vrot.slane %v136, 1
        %v139 = vlaneseq
        %v140 = vshrl.u32 %v139, 7
        %vm141 = vcmp.lt.s32.totalorder %v140, 7
        %v142 = vsel %vm141, %v137, %v138
        %v143 = vsel %vm141, %v138, %v137
        %v144 = vrot.slane %v135, 7
        %v145 = vrot.slane %v136, 7
        %vm146 = vcmp.lt.s32.totalorder %v140, 1
        %v147 = vsel %vm146, %v144, %v145
        %v148 = vsel %vm146, %v145, %v144
        %v149 = vsub.f32 %v142, %v148
        %v150 = vsub.f32 %v143, %v147
        %vm151 = vcmask 1047680
        %152 = vrot.lane.b32.xlu0 %v135, 16
        %v153 = vpop.permute.xlu0 %152
        %v154 = vsel %vm151, %v153, %v135
        %155 = vrot.lane.b32.xlu0 %v136, 16
        %v156 = vpop.permute.xlu0 %155
        %v157 = vsel %vm151, %v156, %v136
        %158 = vrot.lane.b32.xlu0 %v154, 16
        %v159 = vpop.permute.xlu0 %158
        %160 = vrot.lane.b32.xlu0 %v157, 16
        %v161 = vpop.permute.xlu0 %160
        %v162 = vsel %vm151, %v159, %v135
        %v163 = vsel %vm151, %v161, %v136
        %166 = vrot.lane.b32.xlu0 %v162, 114
        %v167 = vpop.permute.xlu0 %166
        %168 = vrot.lane.b32.xlu0 %v163, 114
        %v169 = vpop.permute.xlu0 %168
        %v172 = vsub.f32 %v162, %v167
        %v173 = vsub.f32 %v163, %v169
        %v174 = vmul.f32 %v149, %v149
        %v175 = vmul.f32 %v150, %v150
        %v176 = vmul.f32 %v172, %v172
        %v177 = vmul.f32 %v173, %v173
        %180 = vrot.lane.b32.xlu0 %v176, 127
        %v181 = vpop.permute.xlu0 %180
        %182 = vrot.lane.b32.xlu0 %v177, 127
        %v183 = vpop.permute.xlu0 %182
        %v186 = vadd.f32 %v174, %v181
        %v187 = vadd.f32 %v175, %v183
        %v188 = vadd.f32 %v186, 1e-06
        %v189 = vadd.f32 %v187, 1e-06
        %v190 = vrsqrt.pop %v188
        %v191 = vmul.f32 %v188, %v190
        %vm192 = vcmp.eq.f32.partialorder %v188, inf
        %v193 = vsel %vm192, %v188, %v191
        %vm194 = vcmp.eq.f32.partialorder %v188, 0.0
        %v195 = vand.u32 %v188, 2147483648
        %v196 = vsel %vm194, %v195, %v193
        %v197 = vrsqrt.pop %v189
        %v198 = vmul.f32 %v189, %v197
        %vm199 = vcmp.eq.f32.partialorder %v189, inf
        %v200 = vsel %vm199, %v189, %v198
        %vm201 = vcmp.eq.f32.partialorder %v189, 0.0
        %v202 = vand.u32 %v189, 2147483648
        %v203 = vsel %vm201, %v202, %v200
        %vm204 = vcmask 130048
        %205 = vst.msk [vmem:[%s134] sm:$0xff] %vm204, %v196
        %206 = vst.msk [vmem:[%s134 + $0x8] sm:$0xff] %vm204, %v203
        %v207 = vsub.f32 0.0, %v135
        %v208 = vsub.f32 0.0, %v136
        %v209 = vmul.f32 %v135, %v135
        %v210 = vmul.f32 %v136, %v136
        %213 = vrot.lane.b32.xlu0 %v209, 127
        %v214 = vpop.permute.xlu0 %213
        %215 = vrot.lane.b32.xlu0 %v210, 127
        %v216 = vpop.permute.xlu0 %215
        %v219 = vadd.f32 %v174, %v214
        %v220 = vadd.f32 %v175, %v216
        %v221 = vadd.f32 %v219, 1e-06
        %v222 = vadd.f32 %v220, 1e-06
        %v223 = vrsqrt.pop %v221
        %v224 = vmul.f32 %v221, %v223
        %vm225 = vcmp.eq.f32.partialorder %v221, inf
        %v226 = vsel %vm225, %v221, %v224
        %vm227 = vcmp.eq.f32.partialorder %v221, 0.0
        %v228 = vand.u32 %v221, 2147483648
        %v229 = vsel %vm227, %v228, %v226
        %v230 = vrsqrt.pop %v222
        %v231 = vmul.f32 %v222, %v230
        %vm232 = vcmp.eq.f32.partialorder %v222, inf
        %v233 = vsel %vm232, %v222, %v231
        %vm234 = vcmp.eq.f32.partialorder %v222, 0.0
        %v235 = vand.u32 %v222, 2147483648
        %v236 = vsel %vm234, %v235, %v233
        %vm237 = vcmask 7168
        %238 = vst.msk [vmem:[%s134] sm:$0xff] %vm237, %v229
        %239 = vst.msk [vmem:[%s134 + $0x8] sm:$0xff] %vm237, %v236
        %v240 = vmul.f32 %v207, %v207
        %v241 = vmul.f32 %v208, %v208
        %244 = vrot.lane.b32.xlu0 %v240, 1
        %v245 = vpop.permute.xlu0 %244
        %246 = vrot.lane.b32.xlu0 %v241, 1
        %v247 = vpop.permute.xlu0 %246
        %v250 = vadd.f32 %v174, %v245
        %v251 = vadd.f32 %v175, %v247
        %v252 = vadd.f32 %v250, 1e-06
        %v253 = vadd.f32 %v251, 1e-06
        %v254 = vrsqrt.pop %v252
        %v255 = vmul.f32 %v252, %v254
        %vm256 = vcmp.eq.f32.partialorder %v252, inf
        %v257 = vsel %vm256, %v252, %v255
        %vm258 = vcmp.eq.f32.partialorder %v252, 0.0
        %v259 = vand.u32 %v252, 2147483648
        %v260 = vsel %vm258, %v259, %v257
        %v261 = vrsqrt.pop %v253
        %v262 = vmul.f32 %v253, %v261
        %vm263 = vcmp.eq.f32.partialorder %v253, inf
        %v264 = vsel %vm263, %v253, %v262
        %vm265 = vcmp.eq.f32.partialorder %v253, 0.0
        %v266 = vand.u32 %v253, 2147483648
        %v267 = vsel %vm265, %v266, %v264
        %vm268 = vcmask 130168
        %269 = vst.msk [vmem:[%s134] sm:$0xff] %vm268, %v260
        %270 = vst.msk [vmem:[%s134 + $0x8] sm:$0xff] %vm268, %v267
        %v271 = vlaneseq
        %v272 = vand.u32 %v271, 127
        %vm273 = vcmp.eq.s32.totalorder %v272, 0
        %275 = vset.pattern.permute.xlu0 1
        %276 = vperm.xlu0 %275, %v135
        %v277 = vpop.permute.xlu0 %276
        %280 = vrot.lane.b32.xlu0 %v172, 127
        %v281 = vpop.permute.xlu0 %280
        %v283 = vsel %vm273, %v277, %v281
        %vm284 = vcmp.eq.s32.totalorder %v272, 15
        %286 = vset.pattern.permute.xlu0 14
        %287 = vperm.xlu0 %286, %v207
        %v288 = vpop.permute.xlu0 %287
        %v290 = vsel %vm284, %v288, %v283
        %292 = vset.pattern.permute.xlu0 1
        %293 = vperm.xlu0 %292, %v136
        %v294 = vpop.permute.xlu0 %293
        %297 = vrot.lane.b32.xlu0 %v173, 127
        %v298 = vpop.permute.xlu0 %297
        %v300 = vsel %vm273, %v294, %v298
        %302 = vset.pattern.permute.xlu0 14
        %303 = vperm.xlu0 %302, %v208
        %v304 = vpop.permute.xlu0 %303
        %v306 = vsel %vm284, %v304, %v300
        %v307 = vmul.f32 %v290, %v290
        %v309 = vrot.slane %v307, 7
        %v311 = vadd.f32 %v209, %v309
        %v312 = vadd.f32 %v311, 1e-06
        %v313 = vrsqrt.pop %v312
        %v314 = vmul.f32 %v312, %v313
        %vm315 = vcmp.eq.f32.partialorder %v312, inf
        %v316 = vsel %vm315, %v312, %v314
        %vm317 = vcmp.eq.f32.partialorder %v312, 0.0
        %v318 = vand.u32 %v312, 2147483648
        %v319 = vsel %vm317, %v318, %v316
        %vm320 = vcmask 123905
        %321 = vst.msk [vmem:[%s134 - $0x1] sm:$0x2] %vm320, %v319
        %v322 = vmul.f32 %v306, %v306
        %v324 = vrot.slane %v322, 1
        %v326 = vadd.f32 %v241, %v324
        %v327 = vadd.f32 %v326, 1e-06
        %v328 = vrsqrt.pop %v327
        %v329 = vmul.f32 %v327, %v328
        %vm330 = vcmp.eq.f32.partialorder %v327, inf
        %v331 = vsel %vm330, %v327, %v329
        %vm332 = vcmp.eq.f32.partialorder %v327, 0.0
        %v333 = vand.u32 %v327, 2147483648
        %v334 = vsel %vm332, %v333, %v331
        %vm335 = vcmask 129030
        %336 = vst.msk [vmem:[%s134 + $0x9] sm:$0x40] %vm335, %v334
        %s337 = sand.u32 %s52, 1
        %s338 = scalar_lea.sflag [#allocation4], %s337
        %s339 = sand.u32 %s52, 1
        %s340 = smul.addr %s339, 16
        %s341 = scalar_lea.vmem [#allocation5], %s340
        // Predicated region
        $region29: #{tpu_custom_call.1} parent=23 // pred_check
          %p342 = pneg %p62
        $region30: #{tpu_custom_call.1} parent=23 // pred_check_branch
          %344 = sbr.rel (%p342) target = $region32
        $region31: #{tpu_custom_call.1} parent=23 // pred_region
          %s346 = ssub.s32 256, 256
          %347 = vsyncadd %s338, %s346
          %s348 = smul.addr %s18, 2
          %s349 = smul.addr %s348, 128
          %s350 = scalar_lea.hbm %s1, %s349
          %s351 = sshll.u32 %s341, 4
          %s352 = int_to_ptr.vmem [resolvable:$true] %s351
          %357 = dma.vmem_to_hbm [thread:$0]  %s352, 256, %s350, %s338, 128, 128, 8
        $region32: #{tpu_custom_call.1} parent=23 // pred_fallthru
          _
      $region24: #{tpu_custom_call.1} parent=5 // pred_fallthru
        _
      %p358 = scmp.le.s32.totalorder 2, %s13
      // Predicated region
      $region33: #{tpu_custom_call.1} parent=5 // pred_check
        %p359 = pneg %p358
      $region34: #{tpu_custom_call.1} parent=5 // pred_check_branch
        %361 = sbr.rel (%p359) target = $region36
      $region35: #{tpu_custom_call.1} parent=5 // pred_region
        %s362 = ssub.s32 %s13, 2
        // Predicated region
        $region37: #{tpu_custom_call.1} parent=35 // pred_check
          %p363 = pneg %p68
        $region38: #{tpu_custom_call.1} parent=35 // pred_check_branch
          %365 = sbr.rel (%p363) target = $region40
        $region39: #{tpu_custom_call.1} parent=35 // pred_region
          %s366 = sand.u32 %s53, 1
          %s367 = scalar_lea.sflag [#allocation4], %s366
          %s368 = sand.u32 %s53, 1
          %s369 = smul.addr %s368, 16
          %s370 = scalar_lea.vmem [#allocation5], %s369
          %371 = dma.done %s367, 256
        $region40: #{tpu_custom_call.1} parent=35 // pred_fallthru
          _
      $region36: #{tpu_custom_call.1} parent=5 // pred_fallthru
        _
    $region6: #{tpu_custom_call.1} parent=1 // loop_footer
      %s17 = sadd.s32 1, %s13
    $region7: #{tpu_custom_call.1} parent=1 // loop_footer_branch
      %12 = sbr.rel target = $region3
    $region8: #{tpu_custom_call.1} parent=1 // loop_exit
      _
    %372 = vsyncpa [#allocation3], 1
    %s373 = scalar_lea.sflag [#allocation3], 1
    %374 = vsyncpa %s373, 1
    %375 = vsyncpa [#allocation4], 1
    %s376 = scalar_lea.sflag [#allocation4], 1
    %377 = vsyncpa %s376, 1

</llo_original>
